<compile_context>
chip_gen: v7x
topology: tpu7x:2x2x1
jax: 0.10.0
libtpu: 0.0.40
codegen_flags: <defaults>
</compile_context>

<pallas_src>
import math
from functools import partial

import jax
import jax.numpy as jnp
from jax.experimental import pallas as pl
from jax.experimental.pallas import tpu as pltpu


def _round_up(x: int, m: int) -> int:
    return ((x + m - 1) // m) * m


def _gather_scale_kernel(ids_ref, table_hbm, out_ref, rows_vmem, copy_sem,
                         *, scale, rows_per_step):
    """One token-tile grid step.

    ids_ref:   (n_pad,)             int32 token ids, scalar-prefetched to SMEM
    table_hbm: (V, E)               embedding table, left in HBM (pl.ANY)
    out_ref:   (rows_per_step, E)   output tile (VMEM, auto-pipelined)
    rows_vmem: (rows_per_step, E)   VMEM staging buffer for the gathered rows
    copy_sem:  DMA semaphore shared by all row copies of this step
    """
    step = pl.program_id(0)
    base = step * rows_per_step

    # Issue one row-DMA per token in this tile (all concurrently in flight).
    def issue(r, carry):
        row = ids_ref[base + r]
        pltpu.make_async_copy(
            table_hbm.at[pl.ds(row, 1)],      # (1, E) slice of the HBM table
            rows_vmem.at[pl.ds(r, 1)],        # (1, E) slot in the VMEM buffer
            copy_sem,
        ).start()
        return carry

    jax.lax.fori_loop(0, rows_per_step, issue, 0)

    # Wait for all of them (each wait retires one row-sized transfer on the
    # shared semaphore; after the loop every row is resident).
    def wait(r, carry):
        pltpu.make_async_copy(
            table_hbm.at[pl.ds(0, 1)],
            rows_vmem.at[pl.ds(r, 1)],
            copy_sem,
        ).wait()
        return carry

    jax.lax.fori_loop(0, rows_per_step, wait, 0)

    out_ref[...] = (rows_vmem[...].astype(jnp.float32) * scale).astype(out_ref.dtype)


def token_embedding(tokens, table, *, rows_per_step=256):
    """tokens: integer array of any shape; table: (V, E).

    Returns tokens.shape + (E,) == embedding_lookup(tokens) * sqrt(E), in the
    table's dtype.  Out-of-range ids are clamped to [0, V).
    """
    V, E = table.shape
    lead_shape = tokens.shape
    N = math.prod(lead_shape) if lead_shape else 1
    scale = float(math.sqrt(E))

    # Token-tile size: multiple of 8 sublanes, capped at the padded extent.
    rows_per_step = max(8, min(rows_per_step, _round_up(max(N, 1), 8)))
    rows_per_step = _round_up(rows_per_step, 8)
    n_pad = _round_up(max(N, 1), rows_per_step)

    ids = jnp.clip(tokens.reshape(-1).astype(jnp.int32), 0, V - 1)
    if n_pad != N:
        # Padded ids (0) gather a real row but are sliced off below.
        ids = jnp.pad(ids, (0, n_pad - N))

    grid = (n_pad // rows_per_step,)

    out_flat = pl.pallas_call(
        partial(_gather_scale_kernel, scale=scale, rows_per_step=rows_per_step),
        out_shape=jax.ShapeDtypeStruct((n_pad, E), table.dtype),
        grid_spec=pltpu.PrefetchScalarGridSpec(
            num_scalar_prefetch=1,                      # ids -> SMEM
            grid=grid,
            in_specs=[
                pl.BlockSpec(memory_space=pl.ANY),      # table stays in HBM
            ],
            out_specs=pl.BlockSpec((rows_per_step, E), lambda i, ids: (i, 0)),
            scratch_shapes=[
                pltpu.VMEM((rows_per_step, E), table.dtype),
                pltpu.SemaphoreType.DMA,
            ],
        ),
        compiler_params=pltpu.CompilerParams(
            dimension_semantics=("parallel",)),
    )(ids, table)

    return out_flat[:N].reshape(*lead_shape, E)


if __name__ == "__main__":
    # Small deterministic setup consistent with TokenEmbedding(vocab_size, emb_size).
    # E = 128 keeps stores lane-dense; N = 4*37 = 148 with rows_per_step = 64
    # exercises multiple grid steps and the tail-padding path.
    vocab_size = 1000
    emb_size = 128
    batch, seq = 4, 37

    key = jax.random.PRNGKey(0)
    k_tok, k_emb = jax.random.split(key)

    # Deterministic "parameters": nn.Embedding weight ~ N(0, 1), shape (V, E).
    table = jax.random.normal(k_emb, (vocab_size, emb_size), dtype=jnp.float32)
    # Token ids, shape (B, S).
    tokens = jax.random.randint(k_tok, (batch, seq), 0, vocab_size, dtype=jnp.int32)

    out = token_embedding(tokens, table, rows_per_step=64)
    out = jax.block_until_ready(out)

    # Pure-JAX reference: embedding lookup * sqrt(emb_size).
    ref = jnp.take(table, tokens, axis=0) * math.sqrt(emb_size)

    assert out.shape == (batch, seq, emb_size)
    assert jnp.allclose(out, ref, atol=1e-5, rtol=1e-5)
    print("KERNEL_OK")
</pallas_src>

<mosaic_0001>
module attributes {stable_mosaic.version = 11 : i64} {
  func.func @_gather_scale_kernel(%arg0: i32, %arg1: memref<192xi32, #tpu.memory_space<smem>>, %arg2: memref<1000x128xf32, #tpu.memory_space<any>>, %arg3: memref<64x128xf32, #tpu.memory_space<vmem>>, %arg4: memref<64x128xf32, #tpu.memory_space<vmem>>, %arg5: memref<!tpu.dma_semaphore, #tpu.memory_space<semaphore_mem>>) attributes {dimension_semantics = [#tpu.dimension_semantics<parallel>], iteration_bounds = array<i64: 3>, scalar_prefetch = 1 : i64, scratch_operands = 2 : i64, tpu.core_type = #tpu.core_type<tc>, window_params = [{}, {transform_indices = @transform_1, window_bounds = array<i64: 64, 128>}]} {
    %c64_i32 = arith.constant 64 : i32
    %0 = arith.muli %arg0, %c64_i32 : i32
    %c0_i32 = arith.constant 0 : i32
    %c64_i32_0 = arith.constant 64 : i32
    %1 = arith.addi %c0_i32, %c64_i32_0 : i32
    %c1_i32 = arith.constant 1 : i32
    scf.for %arg6 = %c0_i32 to %1 step %c1_i32  : i32 {
      %7 = arith.addi %0, %arg6 : i32
      %8 = arith.index_cast %7 : i32 to index
      %9 = memref.load %arg1[%8] : memref<192xi32, #tpu.memory_space<smem>>
      %c0_i32_9 = arith.constant 0 : i32
      %10 = tpu.memref_slice %arg2[%9, %c0_i32_9] : memref<1000x128xf32, #tpu.memory_space<any>> -> memref<1x128xf32, #tpu.memory_space<any>>
      %c0_i32_10 = arith.constant 0 : i32
      %11 = tpu.memref_slice %arg4[%arg6, %c0_i32_10] : memref<64x128xf32, #tpu.memory_space<vmem>> -> memref<1x128xf32, #tpu.memory_space<vmem>>
      tpu.enqueue_dma source(%10 : memref<1x128xf32, #tpu.memory_space<any>>) target(%11 : memref<1x128xf32, #tpu.memory_space<vmem>>) target_semaphore(%arg5 : memref<!tpu.dma_semaphore, #tpu.memory_space<semaphore_mem>>)
    }
    %c64_i32_1 = arith.constant 64 : i32
    %c0_i32_2 = arith.constant 0 : i32
    %c64_i32_3 = arith.constant 64 : i32
    %2 = arith.addi %c0_i32_2, %c64_i32_3 : i32
    %c1_i32_4 = arith.constant 1 : i32
    scf.for %arg6 = %c0_i32_2 to %2 step %c1_i32_4  : i32 {
      %c0_i32_9 = arith.constant 0 : i32
      %c0_i32_10 = arith.constant 0 : i32
      %7 = tpu.memref_slice %arg2[%c0_i32_9, %c0_i32_10] : memref<1000x128xf32, #tpu.memory_space<any>> -> memref<1x128xf32, #tpu.memory_space<any>>
      %c0_i32_11 = arith.constant 0 : i32
      %8 = tpu.memref_slice %arg4[%arg6, %c0_i32_11] : memref<64x128xf32, #tpu.memory_space<vmem>> -> memref<1x128xf32, #tpu.memory_space<vmem>>
      tpu.wait_dma2 semaphore(%arg5 : memref<!tpu.dma_semaphore, #tpu.memory_space<semaphore_mem>>) src(%7 : memref<1x128xf32, #tpu.memory_space<any>>) dst(%8 : memref<1x128xf32, #tpu.memory_space<vmem>>)
    }
    %c64_i32_5 = arith.constant 64 : i32
    %c0 = arith.constant 0 : index
    %c0_6 = arith.constant 0 : index
    %3 = vector.load %arg4[%c0, %c0_6] : memref<64x128xf32, #tpu.memory_space<vmem>>, vector<64x128xf32>
    %cst = arith.constant 11.3137083 : f32
    %4 = vector.broadcast %cst : f32 to vector<64x128xf32>
    %5 = arith.mulf %3, %4 : vector<64x128xf32>
    %c0_7 = arith.constant 0 : index
    %c0_8 = arith.constant 0 : index
    %6 = vector.load %arg3[%c0_7, %c0_8] : memref<64x128xf32, #tpu.memory_space<vmem>>, vector<64x128xf32>
    tpu.vector_store %arg3[%c0_7, %c0_8], %5 {strides = array<i32>} : memref<64x128xf32, #tpu.memory_space<vmem>>, vector<64x128xf32>,
    return
  }
  func.func @transform_1(%arg0: i32, %arg1: memref<192xi32, #tpu.memory_space<smem>>) -> (i32, i32) {
    %c0_i32 = arith.constant 0 : i32
    %c0_i32_0 = arith.constant 0 : i32
    return %arg0, %c0_i32 : i32, i32
  }
}

</mosaic_0001>

<llo_original>
// kernel: tpu_custom_call.1
$region0: #{tpu_custom_call.1}
  #allocation0 [shape = 'u32[]', space=smem, size = 0x4, offset = 0x4, fixed_abs, tag = 'smem constant byte address 0x4 - core index']
  #allocation1 [shape = 'u32[144,128]{1,0:T(1,128)}', space=vmem, size = 0x12000, scoped, tag = 'internal scratch']
  #allocation2 [shape = 'f32[64,128]{1,0:T(8,128)}', space=vmem, size = 0x8000, scoped, tag = 'scratch operand']
  #allocation3 [shape = 's32[1]{0}', space=sflag, size = 0x4, scoped, tag = 'scratch operand']
  #allocation4 [shape = 's32[1]{0}', space=sflag, size = 0x4, scoped, tag = 'scoped memory for tpu_custom_call.1']
  #allocation5 [shape = 'u8[1024]{0}', space=smem, size = 0x400, scoped, tag = 'prefetched SMEM operand 0']
  #allocation8 [shape = 's32[]', space=sflag, size = 0x4, offset = 0, fixed_abs, tag = 'sflag constant byte address 0x0 - dummy sync flag']
  #allocation9 [shape = 's32[]', space=sflag, size = 0x4, offset = 0, fixed_abs, tag = 'sflag constant byte address 0x0 - dummy sync flag']
  #allocation10 [shape = 'u32[]', space=smem, size = 0x4, offset = 0x44, fixed_abs, tag = 'smem constant byte address 0x44 - assertion arg 0']
  #allocation11 [shape = 'u32[]', space=smem, size = 0x4, offset = 0x48, fixed_abs, tag = 'smem constant byte address 0x48 - assertion arg 1']
  %s0 = inlined_call_operand.hbm [shape: s32[192], index: 0, kind: input, shape index: {}]
  %s1 = inlined_call_operand.hbm [shape: f32[1000,128], index: 1, kind: input, shape index: {}]
  %s2 = inlined_call_operand.hbm [shape: f32[192,128], index: 2, kind: output, shape index: {}]
  %s3 = sld [smem:[#allocation0]]
  $region43: #{tpu_custom_call.1} parent=0
    _
  %s5 = ssub.s32 1, %s3
  %s6 = scalar_select 0, %s5, %s3
  %8 = dma.hbm_to_smem %s0, 32, [#allocation5], [#allocation4]
  %9 = dma.done [#allocation4], 32
  %10 = sfence
  $region1: #{tpu_custom_call.1} parent=0
    #allocation6 [shape = 'u8[65536]{0}', space=vmem, size = 0x10000, scoped, tag = 'output window, operand 0']
    #allocation7 [shape = 's32[2]{0}', space=sflag, size = 0x8, scoped, tag = 'scoped memory for tpu_custom_call.1']
    %11 = vsyncpa [#allocation7], 0
    %s12 = scalar_lea.sflag [#allocation7], 1
    %13 = vsyncpa %s12, 0
    loop: start=0, step=1, limit=4
    $region2: #{tpu_custom_call.1} parent=1 // loop_pre_header
      _
    $region3: #{tpu_custom_call.1} parent=1 // loop_header
      %s15 = sphi 0, %s19
      %p16 = scmp.ge.s32.totalorder %s15, 4
      %s24 = sphi 0, %s26
      %s27 = sphi 0, %s24
      %s37 = sphi 0, %s27
    $region4: #{tpu_custom_call.1} parent=1 // loop_header_branch
      %18 = sbr.rel (%p16) target = $region8
    $region5: #{tpu_custom_call.1} parent=1 // loop_body
      %s20 = ssub.s32 %s15, 1
      %s21 = sadd.s32 %s15, 1
      %s22 = ssub.s32 %s15, %s21
      %p23 = scmp.eq.s32.totalorder %s22, 0
      %s25 = sadd.s32 %s24, 1
      %s26 = scalar_select %p23, %s24, %s25
      %p28 = pneg %p23
      %p29 = scmp.eq.s32.totalorder %s15, 2
      %p30 = por %p28, %p29
      %p31 = scmp.ne.s32.totalorder %s24, %s27
      %p32 = scmp.eq.s32.totalorder %s15, 0
      %p33 = por %p31, %p32
      %p34 = scmp.ne.s32.totalorder %s24, %s27
      %p35 = scmp.eq.s32.totalorder %s20, 2
      %p36 = por %p34, %p35
      %p38 = scmp.ne.s32.totalorder %s27, %s37
      %p39 = scmp.eq.s32.totalorder %s20, 0
      %p40 = por %p38, %p39
      %p41 = scmp.lt.s32.totalorder %s15, 3
      // Predicated region
      $region9: #{tpu_custom_call.1} parent=5 // pred_check
        %p42 = pneg %p41
      $region10: #{tpu_custom_call.1} parent=5 // pred_check_branch
        %44 = sbr.rel (%p42) target = $region12
      $region11: #{tpu_custom_call.1} parent=5 // pred_region
        %p45 = pneg %p33
        %p46 = pneg %p30
        %s47 = sand.u32 %s24, 1
        %s48 = scalar_lea.sflag [#allocation7], %s47
        %s49 = sand.u32 %s24, 1
        %s50 = smul.addr %s49, 64
        %s51 = scalar_lea.vmem [#allocation6], %s50
        %s52 = smul.u32 8, %s15
        %s53 = smul.u32 %s15, 64
        loop: start=0, step=1, limit=64
        $region13: #{tpu_custom_call.1} parent=11 // loop_pre_header
          _
        $region14: #{tpu_custom_call.1} parent=11 // loop_header
          %s55 = sphi 0, %s59
          %p56 = scmp.ge.s32.totalorder %s55, 64
        $region15: #{tpu_custom_call.1} parent=11 // loop_header_branch
          %58 = sbr.rel (%p56) target = $region19
        $region16: #{tpu_custom_call.1} parent=11 // loop_body
          %s60 = sadd.s32 %s53, %s55
          %s61 = sld [smem:[#allocation5 + %s60]]
          %s62 = smul.addr %s61, 16
          %s63 = scalar_lea.hbm %s1, %s62
          %s64 = scalar_lea.vmem [#allocation2], %s55
          // Predicated region
          $region20: #{tpu_custom_call.1} parent=16 // pred_check
            _
          $region21: #{tpu_custom_call.1} parent=16 // pred_check_branch
            %66 = sbr.rel target = $region23
          $region22: #{tpu_custom_call.1} parent=16 // pred_region
            %67 = sst [smem:[#allocation10]] [#allocation9]
            %68 = sst [smem:[#allocation11]] [#allocation8]
          $region23: #{tpu_custom_call.1} parent=16 // pred_fallthru
            _
          %70 = shalt.err (0)
          %s72 = sshll.u32 %s64, 4
          %s73 = int_to_ptr.vmem [resolvable:$true] %s72
          %75 = dma.hbm_to_vmem [thread:$0]  %s63, 16, %s73, [#allocation3]
        $region17: #{tpu_custom_call.1} parent=11 // loop_footer
          %s59 = sadd.s32 1, %s55
        $region18: #{tpu_custom_call.1} parent=11 // loop_footer_branch
          %54 = sbr.rel target = $region14
        $region19: #{tpu_custom_call.1} parent=11 // loop_exit
          _
        loop: start=0, step=1, limit=64
        $region24: #{tpu_custom_call.1} parent=11 // loop_pre_header
          _
        $region25: #{tpu_custom_call.1} parent=11 // loop_header
          %s77 = sphi 0, %s81
          %p78 = scmp.ge.s32.totalorder %s77, 64
        $region26: #{tpu_custom_call.1} parent=11 // loop_header_branch
          %80 = sbr.rel (%p78) target = $region30
        $region27: #{tpu_custom_call.1} parent=11 // loop_body
          %s82 = smul.u32 1, 1
          %s83 = sshll.u32 %s82, 4
          %84 = dma.done [#allocation3], %s83
        $region28: #{tpu_custom_call.1} parent=11 // loop_footer
          %s81 = sadd.s32 1, %s77
        $region29: #{tpu_custom_call.1} parent=11 // loop_footer_branch
          %76 = sbr.rel target = $region25
        $region30: #{tpu_custom_call.1} parent=11 // loop_exit
          _
        %v85 = vld [vmem:[#allocation2] sm:$0xff]
        %v86 = vld [vmem:[#allocation2 + $0x8] sm:$0xff]
        %v87 = vld [vmem:[#allocation2 + $0x10] sm:$0xff]
        %v88 = vld [vmem:[#allocation2 + $0x18] sm:$0xff]
        %v89 = vld [vmem:[#allocation2 + $0x20] sm:$0xff]
        %v90 = vld [vmem:[#allocation2 + $0x28] sm:$0xff]
        %v91 = vld [vmem:[#allocation2 + $0x30] sm:$0xff]
        %v92 = vld [vmem:[#allocation2 + $0x38] sm:$0xff]
        %v93 = vmul.f32 %v85, 11.313708
        %v94 = vmul.f32 %v86, 11.313708
        %v95 = vmul.f32 %v87, 11.313708
        %v96 = vmul.f32 %v88, 11.313708
        %v97 = vmul.f32 %v89, 11.313708
        %v98 = vmul.f32 %v90, 11.313708
        %v99 = vmul.f32 %v91, 11.313708
        %v100 = vmul.f32 %v92, 11.313708
        %101 = vst [vmem:[%s51] sm:$0xff] %v93
        %102 = vst [vmem:[%s51 + $0x8] sm:$0xff] %v94
        %103 = vst [vmem:[%s51 + $0x10] sm:$0xff] %v95
        %104 = vst [vmem:[%s51 + $0x18] sm:$0xff] %v96
        %105 = vst [vmem:[%s51 + $0x20] sm:$0xff] %v97
        %106 = vst [vmem:[%s51 + $0x28] sm:$0xff] %v98
        %107 = vst [vmem:[%s51 + $0x30] sm:$0xff] %v99
        %108 = vst [vmem:[%s51 + $0x38] sm:$0xff] %v100
        %s109 = sand.u32 %s24, 1
        %s110 = scalar_lea.sflag [#allocation7], %s109
        %s111 = sand.u32 %s24, 1
        %s112 = smul.addr %s111, 64
        %s113 = scalar_lea.vmem [#allocation6], %s112
        // Predicated region
        $region31: #{tpu_custom_call.1} parent=11 // pred_check
          %p114 = pneg %p30
        $region32: #{tpu_custom_call.1} parent=11 // pred_check_branch
          %116 = sbr.rel (%p114) target = $region34
        $region33: #{tpu_custom_call.1} parent=11 // pred_region
          %s117 = smul.u32 8, %s15
          %s119 = ssub.s32 1024, 1024
          %120 = vsyncadd %s110, %s119
          %s121 = smul.addr %s117, 128
          %s122 = scalar_lea.hbm %s2, %s121
          %s123 = sshll.u32 %s113, 4
          %s124 = int_to_ptr.vmem [resolvable:$true] %s123
          %129 = dma.vmem_to_hbm [thread:$0]  %s124, 1024, %s122, %s110, 128, 128, 8
        $region34: #{tpu_custom_call.1} parent=11 // pred_fallthru
          _
      $region12: #{tpu_custom_call.1} parent=5 // pred_fallthru
        _
      %p130 = scmp.le.s32.totalorder 1, %s15
      // Predicated region
      $region35: #{tpu_custom_call.1} parent=5 // pred_check
        %p131 = pneg %p130
      $region36: #{tpu_custom_call.1} parent=5 // pred_check_branch
        %133 = sbr.rel (%p131) target = $region38
      $region37: #{tpu_custom_call.1} parent=5 // pred_region
        %s134 = ssub.s32 %s15, 1
        // Predicated region
        $region39: #{tpu_custom_call.1} parent=37 // pred_check
          %p135 = pneg %p36
        $region40: #{tpu_custom_call.1} parent=37 // pred_check_branch
          %137 = sbr.rel (%p135) target = $region42
        $region41: #{tpu_custom_call.1} parent=37 // pred_region
          %s138 = sand.u32 %s27, 1
          %s139 = scalar_lea.sflag [#allocation7], %s138
          %s140 = sand.u32 %s27, 1
          %s141 = smul.addr %s140, 64
          %s142 = scalar_lea.vmem [#allocation6], %s141
          %143 = dma.done %s139, 1024
        $region42: #{tpu_custom_call.1} parent=37 // pred_fallthru
          _
      $region38: #{tpu_custom_call.1} parent=5 // pred_fallthru
        _
    $region6: #{tpu_custom_call.1} parent=1 // loop_footer
      %s19 = sadd.s32 1, %s15
    $region7: #{tpu_custom_call.1} parent=1 // loop_footer_branch
      %14 = sbr.rel target = $region3
    $region8: #{tpu_custom_call.1} parent=1 // loop_exit
      _
    %144 = vsyncpa [#allocation7], 1
    %s145 = scalar_lea.sflag [#allocation7], 1
    %146 = vsyncpa %s145, 1
  %147 = vsyncmov [#allocation3]
  %s148 = vpop.sfrf %147
  %p149 = scmp.eq.s32.totalorder %s148, 0
  %p150 = pneg %p149
  %152 = shalt.err (%p150)

</llo_original>
